<compile_context>
chip_gen: v5e
topology: v5e:2x2
jax: 0.10.0
libtpu: 0.0.40
codegen_flags: <defaults>
</compile_context>

<pallas_src>
import functools

import jax
import jax.numpy as jnp
from jax.experimental import pallas as pl
from jax.experimental.pallas import tpu as pltpu

_EPS = 1e-5
_LANE = 128

# Row indices into the packed [8, 128] vector array.
_G1, _BE1, _G2, _BE2, _G3, _BE3, _B5 = range(7)


def _pad_axis(x, target, axis, value=0.0):
    pad = target - x.shape[axis]
    if pad <= 0:
        return x
    widths = [(0, 0)] * x.ndim
    widths[axis] = (0, pad)
    return jnp.pad(x, widths, constant_values=value)


def _bn_train(h, gamma, beta):
    """Training-mode BatchNorm1d in scale/shift form (2 VPU ops per element)."""
    mu = jnp.mean(h, axis=0, keepdims=True)
    mean_sq = jnp.mean(h * h, axis=0, keepdims=True)
    var = jnp.maximum(mean_sq - mu * mu, 0.0)
    scale = gamma * jax.lax.rsqrt(var + _EPS)
    shift = beta - mu * scale
    return h * scale + shift


def mlp_net_kernel(x_ref, w_ref, vec_ref, out_ref):
    # x_ref:   [batch, 128] f32
    # w_ref:   [4, 128, 128] bf16  (w1, w2, w3, w5; zero-padded, lane-dense)
    # vec_ref: [8, 128]      f32   (g1, be1, g2, be2, g3, be3, b5, 0)
    x = x_ref[...]

    def vrow(i):
        return vec_ref[pl.ds(i, 1), :]  # [1, 128] f32

    # l1 -> bn1 -> relu   (l1 bias exactly absorbed by training-mode BN)
    h = jnp.dot(x.astype(jnp.bfloat16), w_ref[0],
                preferred_element_type=jnp.float32)
    h = _bn_train(h, vrow(_G1), vrow(_BE1))
    h = jnp.maximum(h, 0.0)

    # l2 -> bn2 -> relu
    h = jnp.dot(h.astype(jnp.bfloat16), w_ref[1],
                preferred_element_type=jnp.float32)
    h = _bn_train(h, vrow(_G2), vrow(_BE2))
    h = jnp.maximum(h, 0.0)

    # l3 -> bn3 -> sigmoid
    h = jnp.dot(h.astype(jnp.bfloat16), w_ref[2],
                preferred_element_type=jnp.float32)
    h = _bn_train(h, vrow(_G3), vrow(_BE3))
    h = jax.nn.sigmoid(h)

    # l5 (logits) — the only bias that survives the BN absorption.
    out = jnp.dot(h.astype(jnp.bfloat16), w_ref[3],
                  preferred_element_type=jnp.float32) + vrow(_B5)
    out_ref[...] = out.astype(out_ref.dtype)


def prepare_params(params):
    """One-time padding/packing of parameters (hoisted out of the forward path).

    Returns:
      w_packed:   [4, 128, 128] bf16  — w1, w2, w3, w5 zero-padded to 128x128.
      vec_packed: [8, 128]      f32   — g1, be1, g2, be2, g3, be3, b5, zeros.
    Zero weight padding + gamma=1 / beta=0 in padded lanes keeps the math exact:
    padded columns stay 0 through BN/ReLU and padded weight rows kill any
    padded-column contribution downstream.
    """
    def pad_w(w):
        return _pad_axis(_pad_axis(w, _LANE, axis=0), _LANE, axis=1)

    w_packed = jnp.stack([
        pad_w(params["w1"]),
        pad_w(params["w2"]),
        pad_w(params["w3"]),
        pad_w(params["w5"]),
    ]).astype(jnp.bfloat16)

    def pad_v(v, value=0.0):
        return _pad_axis(v.reshape(1, -1), _LANE, axis=1, value=value)[0]

    vec_packed = jnp.stack([
        pad_v(params["g1"], 1.0), pad_v(params["be1"]),
        pad_v(params["g2"], 1.0), pad_v(params["be2"]),
        pad_v(params["g3"], 1.0), pad_v(params["be3"]),
        pad_v(params["b5"]),
        jnp.zeros((_LANE,), jnp.float32),          # pad to 8 sublanes
    ]).astype(jnp.float32)

    return w_packed, vec_packed


@functools.partial(jax.jit, static_argnames=("num_classes",))
def mlp_net_forward(x, w_packed, vec_packed, num_classes):
    """x: [batch, in_features] f32. Packed params from prepare_params()."""
    batch = x.shape[0]
    x_p = _pad_axis(x, _LANE, axis=1)

    vmem_spec = pl.BlockSpec(memory_space=pltpu.MemorySpace.VMEM)

    out_padded = pl.pallas_call(
        mlp_net_kernel,
        out_shape=jax.ShapeDtypeStruct((batch, _LANE), jnp.float32),
        in_specs=[vmem_spec, vmem_spec, vmem_spec],
        out_specs=vmem_spec,
        compiler_params=pltpu.CompilerParams(
            vmem_limit_bytes=4 * 1024 * 1024),
    )(x_p, w_packed, vec_packed)

    return out_padded[:, :num_classes]


def init_params(key, in_features, num_classes):
    """Deterministic PyTorch-style init. Linear weights stored as [in, out]."""
    def linear(key, fan_in, fan_out):
        kw, kb = jax.random.split(key)
        bound = 1.0 / jnp.sqrt(fan_in)
        w = jax.random.uniform(kw, (fan_in, fan_out), jnp.float32, -bound, bound)
        b = jax.random.uniform(kb, (1, fan_out), jnp.float32, -bound, bound)
        return w, b

    k1, k2, k3, k5 = jax.random.split(key, 4)
    w1, b1 = linear(k1, in_features, 100)
    w2, b2 = linear(k2, 100, 100)
    w3, b3 = linear(k3, 100, 50)
    w5, b5 = linear(k5, 50, num_classes)

    return dict(
        w1=w1, b1=b1, g1=jnp.ones((1, 100), jnp.float32), be1=jnp.zeros((1, 100), jnp.float32),
        w2=w2, b2=b2, g2=jnp.ones((1, 100), jnp.float32), be2=jnp.zeros((1, 100), jnp.float32),
        w3=w3, b3=b3, g3=jnp.ones((1, 50), jnp.float32), be3=jnp.zeros((1, 50), jnp.float32),
        w5=w5, b5=b5,
    )


def mlp_net_reference(x, params):
    """Pure-JAX f32 reference with the ORIGINAL semantics (biases before BN kept)."""
    def bn(h, g, b):
        mu = jnp.mean(h, axis=0, keepdims=True)
        var = jnp.mean((h - mu) ** 2, axis=0, keepdims=True)
        return (h - mu) * jax.lax.rsqrt(var + _EPS) * g + b

    h = x @ params["w1"] + params["b1"]
    h = jnp.maximum(bn(h, params["g1"], params["be1"]), 0.0)
    h = h @ params["w2"] + params["b2"]
    h = jnp.maximum(bn(h, params["g2"], params["be2"]), 0.0)
    h = h @ params["w3"] + params["b3"]
    h = jax.nn.sigmoid(bn(h, params["g3"], params["be3"]))
    return h @ params["w5"] + params["b5"]


if __name__ == "__main__":
    num_classes = 2
    batch, in_features = 8, 16  # x_train.shape[1] is data-dependent; pick 16

    key = jax.random.PRNGKey(0)
    kx, kp = jax.random.split(key)
    x = jax.random.normal(kx, (batch, in_features), jnp.float32)
    params = init_params(kp, in_features, num_classes)

    # One-time param padding/packing (not part of the per-step forward path).
    w_packed, vec_packed = prepare_params(params)
    w_packed, vec_packed = jax.block_until_ready((w_packed, vec_packed))

    out = mlp_net_forward(x, w_packed, vec_packed, num_classes=num_classes)
    out = jax.block_until_ready(out)
    assert out.shape == (batch, num_classes)

    # Tolerance loosened vs. pure-f32 check because matmul operands are bf16.
    ref = mlp_net_reference(x, params)
    max_err = jnp.max(jnp.abs(out - ref))
    assert jnp.allclose(out, ref, atol=5e-2, rtol=5e-2), (
        "mismatch vs reference (max abs err %r):\n%r\n%r" % (max_err, out, ref))

    print("KERNEL_OK")
</pallas_src>

<mosaic_0001>
module attributes {stable_mosaic.version = 11 : i64} {
  func.func @mlp_net_kernel(%arg0: memref<8x128xf32, #tpu.memory_space<vmem>>, %arg1: memref<4x128x128xbf16, #tpu.memory_space<vmem>>, %arg2: memref<8x128xf32, #tpu.memory_space<vmem>>, %arg3: memref<8x128xf32, #tpu.memory_space<vmem>>) attributes {dimension_semantics = [], scalar_prefetch = 0 : i64, scratch_operands = 0 : i64, tpu.core_type = #tpu.core_type<tc>} {
    %c0 = arith.constant 0 : index
    %c0_0 = arith.constant 0 : index
    %0 = vector.load %arg0[%c0, %c0_0] : memref<8x128xf32, #tpu.memory_space<vmem>>, vector<8x128xf32>
    %1 = arith.truncf %0 : vector<8x128xf32> to vector<8x128xbf16>
    %c0_1 = arith.constant 0 : index
    %c0_2 = arith.constant 0 : index
    %c0_3 = arith.constant 0 : index
    %2 = vector.load %arg1[%c0_1, %c0_2, %c0_3] : memref<4x128x128xbf16, #tpu.memory_space<vmem>>, vector<1x128x128xbf16>
    %3 = vector.shape_cast %2 : vector<1x128x128xbf16> to vector<128x128xbf16>
    %cst = arith.constant dense<0.000000e+00> : vector<8x128xf32>
    %4 = tpu.matmul %1, %3, %cst {dimension_numbers = #tpu.dot_dimension_numbers<[1], [0], [0], [1], [0, 0, 1, 1], [], []>} : vector<8x128xbf16>, vector<128x128xbf16>, vector<8x128xf32> -> vector<8x128xf32>
    %c0_4 = arith.constant 0 : index
    %c0_5 = arith.constant 0 : index
    %5 = vector.load %arg2[%c0_4, %c0_5] : memref<8x128xf32, #tpu.memory_space<vmem>>, vector<1x128xf32>
    %c1 = arith.constant 1 : index
    %c0_6 = arith.constant 0 : index
    %6 = vector.load %arg2[%c1, %c0_6] : memref<8x128xf32, #tpu.memory_space<vmem>>, vector<1x128xf32>
    %cst_7 = arith.constant dense<0.000000e+00> : vector<128xf32>
    %7 = vector.multi_reduction <add>, %4, %cst_7 [0] : vector<8x128xf32> to vector<128xf32>
    %8 = vector.shape_cast %7 : vector<128xf32> to vector<1x128xf32>
    %cst_8 = arith.constant 8.000000e+00 : f32
    %9 = vector.broadcast %cst_8 : f32 to vector<1x128xf32>
    %10 = arith.divf %8, %9 : vector<1x128xf32>
    %11 = arith.mulf %4, %4 : vector<8x128xf32>
    %cst_9 = arith.constant dense<0.000000e+00> : vector<128xf32>
    %12 = vector.multi_reduction <add>, %11, %cst_9 [0] : vector<8x128xf32> to vector<128xf32>
    %13 = vector.shape_cast %12 : vector<128xf32> to vector<1x128xf32>
    %cst_10 = arith.constant 8.000000e+00 : f32
    %14 = vector.broadcast %cst_10 : f32 to vector<1x128xf32>
    %15 = arith.divf %13, %14 : vector<1x128xf32>
    %16 = arith.mulf %10, %10 : vector<1x128xf32>
    %17 = arith.subf %15, %16 : vector<1x128xf32>
    %cst_11 = arith.constant 0.000000e+00 : f32
    %18 = vector.broadcast %cst_11 : f32 to vector<1x128xf32>
    %19 = arith.maximumf %17, %18 : vector<1x128xf32>
    %cst_12 = arith.constant 9.99999974E-6 : f32
    %20 = vector.broadcast %cst_12 : f32 to vector<1x128xf32>
    %21 = arith.addf %19, %20 : vector<1x128xf32>
    %22 = math.rsqrt %21 : vector<1x128xf32>
    %23 = arith.mulf %5, %22 : vector<1x128xf32>
    %24 = arith.mulf %10, %23 : vector<1x128xf32>
    %25 = arith.subf %6, %24 : vector<1x128xf32>
    %26 = vector.broadcast %23 : vector<1x128xf32> to vector<8x128xf32>
    %27 = arith.mulf %4, %26 : vector<8x128xf32>
    %28 = vector.broadcast %25 : vector<1x128xf32> to vector<8x128xf32>
    %29 = arith.addf %27, %28 : vector<8x128xf32>
    %cst_13 = arith.constant 0.000000e+00 : f32
    %30 = vector.broadcast %cst_13 : f32 to vector<8x128xf32>
    %31 = arith.maximumf %29, %30 : vector<8x128xf32>
    %32 = arith.truncf %31 : vector<8x128xf32> to vector<8x128xbf16>
    %c1_14 = arith.constant 1 : index
    %c0_15 = arith.constant 0 : index
    %c0_16 = arith.constant 0 : index
    %33 = vector.load %arg1[%c1_14, %c0_15, %c0_16] : memref<4x128x128xbf16, #tpu.memory_space<vmem>>, vector<1x128x128xbf16>
    %34 = vector.shape_cast %33 : vector<1x128x128xbf16> to vector<128x128xbf16>
    %cst_17 = arith.constant dense<0.000000e+00> : vector<8x128xf32>
    %35 = tpu.matmul %32, %34, %cst_17 {dimension_numbers = #tpu.dot_dimension_numbers<[1], [0], [0], [1], [0, 0, 1, 1], [], []>} : vector<8x128xbf16>, vector<128x128xbf16>, vector<8x128xf32> -> vector<8x128xf32>
    %c2 = arith.constant 2 : index
    %c0_18 = arith.constant 0 : index
    %36 = vector.load %arg2[%c2, %c0_18] : memref<8x128xf32, #tpu.memory_space<vmem>>, vector<1x128xf32>
    %c3 = arith.constant 3 : index
    %c0_19 = arith.constant 0 : index
    %37 = vector.load %arg2[%c3, %c0_19] : memref<8x128xf32, #tpu.memory_space<vmem>>, vector<1x128xf32>
    %cst_20 = arith.constant dense<0.000000e+00> : vector<128xf32>
    %38 = vector.multi_reduction <add>, %35, %cst_20 [0] : vector<8x128xf32> to vector<128xf32>
    %39 = vector.shape_cast %38 : vector<128xf32> to vector<1x128xf32>
    %cst_21 = arith.constant 8.000000e+00 : f32
    %40 = vector.broadcast %cst_21 : f32 to vector<1x128xf32>
    %41 = arith.divf %39, %40 : vector<1x128xf32>
    %42 = arith.mulf %35, %35 : vector<8x128xf32>
    %cst_22 = arith.constant dense<0.000000e+00> : vector<128xf32>
    %43 = vector.multi_reduction <add>, %42, %cst_22 [0] : vector<8x128xf32> to vector<128xf32>
    %44 = vector.shape_cast %43 : vector<128xf32> to vector<1x128xf32>
    %cst_23 = arith.constant 8.000000e+00 : f32
    %45 = vector.broadcast %cst_23 : f32 to vector<1x128xf32>
    %46 = arith.divf %44, %45 : vector<1x128xf32>
    %47 = arith.mulf %41, %41 : vector<1x128xf32>
    %48 = arith.subf %46, %47 : vector<1x128xf32>
    %cst_24 = arith.constant 0.000000e+00 : f32
    %49 = vector.broadcast %cst_24 : f32 to vector<1x128xf32>
    %50 = arith.maximumf %48, %49 : vector<1x128xf32>
    %cst_25 = arith.constant 9.99999974E-6 : f32
    %51 = vector.broadcast %cst_25 : f32 to vector<1x128xf32>
    %52 = arith.addf %50, %51 : vector<1x128xf32>
    %53 = math.rsqrt %52 : vector<1x128xf32>
    %54 = arith.mulf %36, %53 : vector<1x128xf32>
    %55 = arith.mulf %41, %54 : vector<1x128xf32>
    %56 = arith.subf %37, %55 : vector<1x128xf32>
    %57 = vector.broadcast %54 : vector<1x128xf32> to vector<8x128xf32>
    %58 = arith.mulf %35, %57 : vector<8x128xf32>
    %59 = vector.broadcast %56 : vector<1x128xf32> to vector<8x128xf32>
    %60 = arith.addf %58, %59 : vector<8x128xf32>
    %cst_26 = arith.constant 0.000000e+00 : f32
    %61 = vector.broadcast %cst_26 : f32 to vector<8x128xf32>
    %62 = arith.maximumf %60, %61 : vector<8x128xf32>
    %63 = arith.truncf %62 : vector<8x128xf32> to vector<8x128xbf16>
    %c2_27 = arith.constant 2 : index
    %c0_28 = arith.constant 0 : index
    %c0_29 = arith.constant 0 : index
    %64 = vector.load %arg1[%c2_27, %c0_28, %c0_29] : memref<4x128x128xbf16, #tpu.memory_space<vmem>>, vector<1x128x128xbf16>
    %65 = vector.shape_cast %64 : vector<1x128x128xbf16> to vector<128x128xbf16>
    %cst_30 = arith.constant dense<0.000000e+00> : vector<8x128xf32>
    %66 = tpu.matmul %63, %65, %cst_30 {dimension_numbers = #tpu.dot_dimension_numbers<[1], [0], [0], [1], [0, 0, 1, 1], [], []>} : vector<8x128xbf16>, vector<128x128xbf16>, vector<8x128xf32> -> vector<8x128xf32>
    %c4 = arith.constant 4 : index
    %c0_31 = arith.constant 0 : index
    %67 = vector.load %arg2[%c4, %c0_31] : memref<8x128xf32, #tpu.memory_space<vmem>>, vector<1x128xf32>
    %c5 = arith.constant 5 : index
    %c0_32 = arith.constant 0 : index
    %68 = vector.load %arg2[%c5, %c0_32] : memref<8x128xf32, #tpu.memory_space<vmem>>, vector<1x128xf32>
    %cst_33 = arith.constant dense<0.000000e+00> : vector<128xf32>
    %69 = vector.multi_reduction <add>, %66, %cst_33 [0] : vector<8x128xf32> to vector<128xf32>
    %70 = vector.shape_cast %69 : vector<128xf32> to vector<1x128xf32>
    %cst_34 = arith.constant 8.000000e+00 : f32
    %71 = vector.broadcast %cst_34 : f32 to vector<1x128xf32>
    %72 = arith.divf %70, %71 : vector<1x128xf32>
    %73 = arith.mulf %66, %66 : vector<8x128xf32>
    %cst_35 = arith.constant dense<0.000000e+00> : vector<128xf32>
    %74 = vector.multi_reduction <add>, %73, %cst_35 [0] : vector<8x128xf32> to vector<128xf32>
    %75 = vector.shape_cast %74 : vector<128xf32> to vector<1x128xf32>
    %cst_36 = arith.constant 8.000000e+00 : f32
    %76 = vector.broadcast %cst_36 : f32 to vector<1x128xf32>
    %77 = arith.divf %75, %76 : vector<1x128xf32>
    %78 = arith.mulf %72, %72 : vector<1x128xf32>
    %79 = arith.subf %77, %78 : vector<1x128xf32>
    %cst_37 = arith.constant 0.000000e+00 : f32
    %80 = vector.broadcast %cst_37 : f32 to vector<1x128xf32>
    %81 = arith.maximumf %79, %80 : vector<1x128xf32>
    %cst_38 = arith.constant 9.99999974E-6 : f32
    %82 = vector.broadcast %cst_38 : f32 to vector<1x128xf32>
    %83 = arith.addf %81, %82 : vector<1x128xf32>
    %84 = math.rsqrt %83 : vector<1x128xf32>
    %85 = arith.mulf %67, %84 : vector<1x128xf32>
    %86 = arith.mulf %72, %85 : vector<1x128xf32>
    %87 = arith.subf %68, %86 : vector<1x128xf32>
    %88 = vector.broadcast %85 : vector<1x128xf32> to vector<8x128xf32>
    %89 = arith.mulf %66, %88 : vector<8x128xf32>
    %90 = vector.broadcast %87 : vector<1x128xf32> to vector<8x128xf32>
    %91 = arith.addf %89, %90 : vector<8x128xf32>
    %92 = arith.negf %91 : vector<8x128xf32>
    %93 = math.exp %92 : vector<8x128xf32>
    %cst_39 = arith.constant 1.000000e+00 : f32
    %94 = vector.broadcast %cst_39 : f32 to vector<8x128xf32>
    %95 = arith.addf %94, %93 : vector<8x128xf32>
    %96 = arith.divf %94, %95 : vector<8x128xf32>
    %97 = arith.truncf %96 : vector<8x128xf32> to vector<8x128xbf16>
    %c3_40 = arith.constant 3 : index
    %c0_41 = arith.constant 0 : index
    %c0_42 = arith.constant 0 : index
    %98 = vector.load %arg1[%c3_40, %c0_41, %c0_42] : memref<4x128x128xbf16, #tpu.memory_space<vmem>>, vector<1x128x128xbf16>
    %99 = vector.shape_cast %98 : vector<1x128x128xbf16> to vector<128x128xbf16>
    %cst_43 = arith.constant dense<0.000000e+00> : vector<8x128xf32>
    %100 = tpu.matmul %97, %99, %cst_43 {dimension_numbers = #tpu.dot_dimension_numbers<[1], [0], [0], [1], [0, 0, 1, 1], [], []>} : vector<8x128xbf16>, vector<128x128xbf16>, vector<8x128xf32> -> vector<8x128xf32>
    %c6 = arith.constant 6 : index
    %c0_44 = arith.constant 0 : index
    %101 = vector.load %arg2[%c6, %c0_44] : memref<8x128xf32, #tpu.memory_space<vmem>>, vector<1x128xf32>
    %102 = vector.broadcast %101 : vector<1x128xf32> to vector<8x128xf32>
    %103 = arith.addf %100, %102 : vector<8x128xf32>
    %c0_45 = arith.constant 0 : index
    %c0_46 = arith.constant 0 : index
    %104 = vector.load %arg3[%c0_45, %c0_46] : memref<8x128xf32, #tpu.memory_space<vmem>>, vector<8x128xf32>
    tpu.vector_store %arg3[%c0_45, %c0_46], %103 {strides = array<i32>} : memref<8x128xf32, #tpu.memory_space<vmem>>, vector<8x128xf32>,
    return
  }
}

</mosaic_0001>

<llo_original>
// kernel: mlp_net_forward.1
$region0: #{mlp_net_forward.1}
  #allocation0 [shape = 'u32[]', space=smem, size = 0x4, offset = 0x4, fixed_abs, tag = 'smem constant byte address 0x4 - core index']
  #allocation1 [shape = 'u32[72,128]{1,0:T(1,128)}', space=vmem, size = 0x9000, scoped, tag = 'internal scratch']
  %s0 = inlined_call_operand.vmem [shape: f32[8,128], index: 0, kind: input, shape index: {}]
  %s1 = inlined_call_operand.hbm [shape: bf16[4,128,128], index: 1, kind: input, shape index: {}]
  %s2 = inlined_call_operand.vmem [shape: f32[8,128], index: 2, kind: input, shape index: {}]
  %s3 = inlined_call_operand.vmem [shape: f32[8,128], index: 3, kind: output, shape index: {}]
  %s4 = sld [smem:[#allocation0]]
  $region26: #{mlp_net_forward.1} parent=0
    _
  %s6 = ssub.s32 1, %s4
  %s7 = scalar_select 0, %s6, %s4
  $region1: #{mlp_net_forward.1} parent=0
    #allocation2 [shape = 'u8[131072]{0}', space=vmem, size = 0x20000, scoped, tag = 'input window, operand 1, single buffered']
    #allocation3 [shape = 's32[1]{0}', space=sflag, size = 0x4, scoped, tag = 'scoped memory for mlp_net_forward.1']
    %8 = vsyncpa [#allocation3], 0
    // Predicated region
    $region2: #{mlp_net_forward.1} parent=1 // pred_check
      _
    $region3: #{mlp_net_forward.1} parent=1 // pred_check_branch
      %10 = sbr.rel (0) target = $region5
    $region4: #{mlp_net_forward.1} parent=1 // pred_region
      _
    $region5: #{mlp_net_forward.1} parent=1 // pred_fallthru
      _
    // Predicated region
    $region6: #{mlp_net_forward.1} parent=1 // pred_check
      _
    $region7: #{mlp_net_forward.1} parent=1 // pred_check_branch
      %12 = sbr.rel (0) target = $region9
    $region8: #{mlp_net_forward.1} parent=1 // pred_region
      %14 = vsyncadd [#allocation3], 0
      %s15 = sshll.u32 %s1, 4
      %s16 = int_to_ptr.hbm [resolvable:$true] %s15
      %s17 = sshll.u32 [#allocation2], 4
      %s18 = int_to_ptr.vmem [resolvable:$true] %s17
      %23 = dma.hbm_to_vmem [thread:$0]  %s16, 4096, %s18, [#allocation3], 64, 64, 4
    $region9: #{mlp_net_forward.1} parent=1 // pred_fallthru
      _
    // Predicated region
    $region10: #{mlp_net_forward.1} parent=1 // pred_check
      _
    $region11: #{mlp_net_forward.1} parent=1 // pred_check_branch
      %25 = sbr.rel (0) target = $region13
    $region12: #{mlp_net_forward.1} parent=1 // pred_region
      _
    $region13: #{mlp_net_forward.1} parent=1 // pred_fallthru
      _
    // Predicated region
    $region14: #{mlp_net_forward.1} parent=1 // pred_check
      _
    $region15: #{mlp_net_forward.1} parent=1 // pred_check_branch
      %27 = sbr.rel (0) target = $region17
    $region16: #{mlp_net_forward.1} parent=1 // pred_region
      %29 = dma.done [#allocation3], 4096
    $region17: #{mlp_net_forward.1} parent=1 // pred_fallthru
      _
    %v30 = vld [vmem:[%s0] sm:$0xff]
    %v31 = vpack.c.bf16 %v30, %v30
    %v32 = vld [vmem:[#allocation2] sm:$0xf]
    %v33 = vld [vmem:[#allocation2 + $0x4] sm:$0xf]
    %v34 = vld [vmem:[#allocation2 + $0x8] sm:$0xf]
    %v35 = vld [vmem:[#allocation2 + $0xc] sm:$0xf]
    %v36 = vld [vmem:[#allocation2 + $0x10] sm:$0xf]
    %v37 = vld [vmem:[#allocation2 + $0x14] sm:$0xf]
    %v38 = vld [vmem:[#allocation2 + $0x18] sm:$0xf]
    %v39 = vld [vmem:[#allocation2 + $0x1c] sm:$0xf]
    %v40 = vld [vmem:[#allocation2 + $0x20] sm:$0xf]
    %v41 = vld [vmem:[#allocation2 + $0x24] sm:$0xf]
    %v42 = vld [vmem:[#allocation2 + $0x28] sm:$0xf]
    %v43 = vld [vmem:[#allocation2 + $0x2c] sm:$0xf]
    %v44 = vld [vmem:[#allocation2 + $0x30] sm:$0xf]
    %v45 = vld [vmem:[#allocation2 + $0x34] sm:$0xf]
    %v46 = vld [vmem:[#allocation2 + $0x38] sm:$0xf]
    %v47 = vld [vmem:[#allocation2 + $0x3c] sm:$0xf]
    %v64 = vunpack.c.l.b16 %v32
    %v65 = vunpack.c.l.b16 %v33
    %v66 = vunpack.c.l.b16 %v34
    %v67 = vunpack.c.l.b16 %v35
    %v68 = vunpack.c.l.b16 %v36
    %v69 = vunpack.c.l.b16 %v37
    %v70 = vunpack.c.l.b16 %v38
    %v71 = vunpack.c.l.b16 %v39
    %v72 = vunpack.c.l.b16 %v40
    %v73 = vunpack.c.l.b16 %v41
    %v74 = vunpack.c.l.b16 %v42
    %v75 = vunpack.c.l.b16 %v43
    %v76 = vunpack.c.l.b16 %v44
    %v77 = vunpack.c.l.b16 %v45
    %v78 = vunpack.c.l.b16 %v46
    %v79 = vunpack.c.l.b16 %v47
    %v80 = vpack.c.b16 %v65, %v64
    %v81 = vpack.c.b16 %v67, %v66
    %v82 = vpack.c.b16 %v69, %v68
    %v83 = vpack.c.b16 %v71, %v70
    %v84 = vpack.c.b16 %v73, %v72
    %v85 = vpack.c.b16 %v75, %v74
    %v86 = vpack.c.b16 %v77, %v76
    %v87 = vpack.c.b16 %v79, %v78
    %96 = vmatpush.bf16.msra.mxu0 %v87
    %97 = vmatpush.bf16.msra.mxu0 %v86
    %98 = vmatpush.bf16.msra.mxu0 %v85
    %99 = vmatpush.bf16.msra.mxu0 %v84
    %100 = vmatpush.bf16.msra.mxu0 %v83
    %101 = vmatpush.bf16.msra.mxu0 %v82
    %102 = vmatpush.bf16.msra.mxu0 %v81
    %103 = vmatpush.bf16.msra.mxu0 %v80
    %104 = vmatmul.bf16.gmra.mxu0 %v31
    %v105 = vpop.f32.mrf.mxu0
    %v106 = vadd.f32 0.0, %v105
    %v107 = vpop.f32.mrf.mxu0
    %108 = vdwg.mxu0
    %v109 = vld [vmem:[%s2] sm:$0x1]
    %v110 = vld [vmem:[%s2 + $0x1] sm:$0x1]
    %v111 = vrot.slane %v106, 4
    %v112 = vadd.f32 %v106, %v111
    %v113 = vrot.slane %v112, 2
    %v114 = vadd.f32 %v112, %v113
    %v115 = vrot.slane %v114, 1
    %v116 = vadd.f32 %v114, %v115
    %v117 = vrcp.pop 8.0
    %v118 = vmul.f32 8.0, %v117
    %v119 = vsub.f32 1.0, %v118
    %v120 = vmul.f32 %v117, %v119
    %v121 = vadd.f32 %v117, %v120
    %vm122 = vweird.f32 %v117
    %v123 = vsel %vm122, %v117, %v121
    %v124 = vmul.f32 %v116, %v123
    %v125 = vmul.f32 %v106, %v106
    %v126 = vrot.slane %v125, 4
    %v127 = vadd.f32 %v125, %v126
    %v128 = vrot.slane %v127, 2
    %v129 = vadd.f32 %v127, %v128
    %v130 = vrot.slane %v129, 1
    %v131 = vadd.f32 %v129, %v130
    %v132 = vmul.f32 %v131, %v123
    %v133 = vmul.f32 %v124, %v124
    %v134 = vsub.f32 %v132, %v133
    %v135 = vmax.f32 %v134, 0.0
    %v136 = vadd.f32 %v135, 1e-05
    %v137 = vrsqrt.pop %v136
    %v138 = vmul.f32 %v137, %v136
    %v139 = vmul.f32 %v138, %v137
    %v140 = vmul.f32 0.5, %v139
    %v141 = vsub.f32 1.5, %v140
    %v142 = vmul.f32 %v137, %v141
    %vm143 = vweird.f32 %v136
    %vm144 = vweird.f32 %v137
    %vm145 = vmor %vm143, %vm144
    %v146 = vsel %vm145, %v137, %v142
    %v147 = vmul.f32 %v109, %v146
    %v148 = vmul.f32 %v124, %v147
    %v149 = vsub.f32 %v110, %v148
    %v150 = vperm.slane %v147, 0
    %v151 = vmul.f32 %v106, %v150
    %v152 = vperm.slane %v149, 0
    %v153 = vadd.f32 %v151, %v152
    %v154 = vmax.f32 %v153, 0.0
    %v155 = vpack.c.bf16 %v154, %v154
    %s156 = scalar_lea.vmem [#allocation2], 64
    %v157 = vld [vmem:[%s156] sm:$0xf]
    %v158 = vld [vmem:[%s156 + $0x4] sm:$0xf]
    %v159 = vld [vmem:[%s156 + $0x8] sm:$0xf]
    %v160 = vld [vmem:[%s156 + $0xc] sm:$0xf]
    %v161 = vld [vmem:[%s156 + $0x10] sm:$0xf]
    %v162 = vld [vmem:[%s156 + $0x14] sm:$0xf]
    %v163 = vld [vmem:[%s156 + $0x18] sm:$0xf]
    %v164 = vld [vmem:[%s156 + $0x1c] sm:$0xf]
    %v165 = vld [vmem:[%s156 + $0x20] sm:$0xf]
    %v166 = vld [vmem:[%s156 + $0x24] sm:$0xf]
    %v167 = vld [vmem:[%s156 + $0x28] sm:$0xf]
    %v168 = vld [vmem:[%s156 + $0x2c] sm:$0xf]
    %v169 = vld [vmem:[%s156 + $0x30] sm:$0xf]
    %v170 = vld [vmem:[%s156 + $0x34] sm:$0xf]
    %v171 = vld [vmem:[%s156 + $0x38] sm:$0xf]
    %v172 = vld [vmem:[%s156 + $0x3c] sm:$0xf]
    %v189 = vunpack.c.l.b16 %v157
    %v190 = vunpack.c.l.b16 %v158
    %v191 = vunpack.c.l.b16 %v159
    %v192 = vunpack.c.l.b16 %v160
    %v193 = vunpack.c.l.b16 %v161
    %v194 = vunpack.c.l.b16 %v162
    %v195 = vunpack.c.l.b16 %v163
    %v196 = vunpack.c.l.b16 %v164
    %v197 = vunpack.c.l.b16 %v165
    %v198 = vunpack.c.l.b16 %v166
    %v199 = vunpack.c.l.b16 %v167
    %v200 = vunpack.c.l.b16 %v168
    %v201 = vunpack.c.l.b16 %v169
    %v202 = vunpack.c.l.b16 %v170
    %v203 = vunpack.c.l.b16 %v171
    %v204 = vunpack.c.l.b16 %v172
    %v205 = vpack.c.b16 %v190, %v189
    %v206 = vpack.c.b16 %v192, %v191
    %v207 = vpack.c.b16 %v194, %v193
    %v208 = vpack.c.b16 %v196, %v195
    %v209 = vpack.c.b16 %v198, %v197
    %v210 = vpack.c.b16 %v200, %v199
    %v211 = vpack.c.b16 %v202, %v201
    %v212 = vpack.c.b16 %v204, %v203
    %221 = vmatpush.bf16.msra.mxu0 %v212
    %222 = vmatpush.bf16.msra.mxu0 %v211
    %223 = vmatpush.bf16.msra.mxu0 %v210
    %224 = vmatpush.bf16.msra.mxu0 %v209
    %225 = vmatpush.bf16.msra.mxu0 %v208
    %226 = vmatpush.bf16.msra.mxu0 %v207
    %227 = vmatpush.bf16.msra.mxu0 %v206
    %228 = vmatpush.bf16.msra.mxu0 %v205
    %229 = vmatmul.bf16.gmra.mxu0 %v155
    %v230 = vpop.f32.mrf.mxu0
    %v231 = vadd.f32 0.0, %v230
    %v232 = vpop.f32.mrf.mxu0
    %233 = vdwg.mxu0
    %v234 = vld [vmem:[%s2 + $0x2] sm:$0x1]
    %v235 = vld [vmem:[%s2 + $0x3] sm:$0x1]
    %v236 = vrot.slane %v231, 4
    %v237 = vadd.f32 %v231, %v236
    %v238 = vrot.slane %v237, 2
    %v239 = vadd.f32 %v237, %v238
    %v240 = vrot.slane %v239, 1
    %v241 = vadd.f32 %v239, %v240
    %v242 = vmul.f32 %v241, %v123
    %v243 = vmul.f32 %v231, %v231
    %v244 = vrot.slane %v243, 4
    %v245 = vadd.f32 %v243, %v244
    %v246 = vrot.slane %v245, 2
    %v247 = vadd.f32 %v245, %v246
    %v248 = vrot.slane %v247, 1
    %v249 = vadd.f32 %v247, %v248
    %v250 = vmul.f32 %v249, %v123
    %v251 = vmul.f32 %v242, %v242
    %v252 = vsub.f32 %v250, %v251
    %v253 = vmax.f32 %v252, 0.0
    %v254 = vadd.f32 %v253, 1e-05
    %v255 = vrsqrt.pop %v254
    %v256 = vmul.f32 %v255, %v254
    %v257 = vmul.f32 %v256, %v255
    %v258 = vmul.f32 0.5, %v257
    %v259 = vsub.f32 1.5, %v258
    %v260 = vmul.f32 %v255, %v259
    %vm261 = vweird.f32 %v254
    %vm262 = vweird.f32 %v255
    %vm263 = vmor %vm261, %vm262
    %v264 = vsel %vm263, %v255, %v260
    %v265 = vmul.f32 %v234, %v264
    %v266 = vmul.f32 %v242, %v265
    %v267 = vsub.f32 %v235, %v266
    %v268 = vperm.slane %v265, 0
    %v269 = vmul.f32 %v231, %v268
    %v270 = vperm.slane %v267, 0
    %v271 = vadd.f32 %v269, %v270
    %v272 = vmax.f32 %v271, 0.0
    %v273 = vpack.c.bf16 %v272, %v272
    %s274 = scalar_lea.vmem [#allocation2], 128
    %v275 = vld [vmem:[%s274] sm:$0xf]
    %v276 = vld [vmem:[%s274 + $0x4] sm:$0xf]
    %v277 = vld [vmem:[%s274 + $0x8] sm:$0xf]
    %v278 = vld [vmem:[%s274 + $0xc] sm:$0xf]
    %v279 = vld [vmem:[%s274 + $0x10] sm:$0xf]
    %v280 = vld [vmem:[%s274 + $0x14] sm:$0xf]
    %v281 = vld [vmem:[%s274 + $0x18] sm:$0xf]
    %v282 = vld [vmem:[%s274 + $0x1c] sm:$0xf]
    %v283 = vld [vmem:[%s274 + $0x20] sm:$0xf]
    %v284 = vld [vmem:[%s274 + $0x24] sm:$0xf]
    %v285 = vld [vmem:[%s274 + $0x28] sm:$0xf]
    %v286 = vld [vmem:[%s274 + $0x2c] sm:$0xf]
    %v287 = vld [vmem:[%s274 + $0x30] sm:$0xf]
    %v288 = vld [vmem:[%s274 + $0x34] sm:$0xf]
    %v289 = vld [vmem:[%s274 + $0x38] sm:$0xf]
    %v290 = vld [vmem:[%s274 + $0x3c] sm:$0xf]
    %v307 = vunpack.c.l.b16 %v275
    %v308 = vunpack.c.l.b16 %v276
    %v309 = vunpack.c.l.b16 %v277
    %v310 = vunpack.c.l.b16 %v278
    %v311 = vunpack.c.l.b16 %v279
    %v312 = vunpack.c.l.b16 %v280
    %v313 = vunpack.c.l.b16 %v281
    %v314 = vunpack.c.l.b16 %v282
    %v315 = vunpack.c.l.b16 %v283
    %v316 = vunpack.c.l.b16 %v284
    %v317 = vunpack.c.l.b16 %v285
    %v318 = vunpack.c.l.b16 %v286
    %v319 = vunpack.c.l.b16 %v287
    %v320 = vunpack.c.l.b16 %v288
    %v321 = vunpack.c.l.b16 %v289
    %v322 = vunpack.c.l.b16 %v290
    %v323 = vpack.c.b16 %v308, %v307
    %v324 = vpack.c.b16 %v310, %v309
    %v325 = vpack.c.b16 %v312, %v311
    %v326 = vpack.c.b16 %v314, %v313
    %v327 = vpack.c.b16 %v316, %v315
    %v328 = vpack.c.b16 %v318, %v317
    %v329 = vpack.c.b16 %v320, %v319
    %v330 = vpack.c.b16 %v322, %v321
    %339 = vmatpush.bf16.msra.mxu0 %v330
    %340 = vmatpush.bf16.msra.mxu0 %v329
    %341 = vmatpush.bf16.msra.mxu0 %v328
    %342 = vmatpush.bf16.msra.mxu0 %v327
    %343 = vmatpush.bf16.msra.mxu0 %v326
    %344 = vmatpush.bf16.msra.mxu0 %v325
    %345 = vmatpush.bf16.msra.mxu0 %v324
    %346 = vmatpush.bf16.msra.mxu0 %v323
    %347 = vmatmul.bf16.gmra.mxu0 %v273
    %v348 = vpop.f32.mrf.mxu0
    %v349 = vadd.f32 0.0, %v348
    %v350 = vpop.f32.mrf.mxu0
    %351 = vdwg.mxu0
    %v352 = vld [vmem:[%s2 + $0x4] sm:$0x1]
    %v353 = vld [vmem:[%s2 + $0x5] sm:$0x1]
    %v354 = vrot.slane %v349, 4
    %v355 = vadd.f32 %v349, %v354
    %v356 = vrot.slane %v355, 2
    %v357 = vadd.f32 %v355, %v356
    %v358 = vrot.slane %v357, 1
    %v359 = vadd.f32 %v357, %v358
    %v360 = vmul.f32 %v359, %v123
    %v361 = vmul.f32 %v349, %v349
    %v362 = vrot.slane %v361, 4
    %v363 = vadd.f32 %v361, %v362
    %v364 = vrot.slane %v363, 2
    %v365 = vadd.f32 %v363, %v364
    %v366 = vrot.slane %v365, 1
    %v367 = vadd.f32 %v365, %v366
    %v368 = vmul.f32 %v367, %v123
    %v369 = vmul.f32 %v360, %v360
    %v370 = vsub.f32 %v368, %v369
    %v371 = vmax.f32 %v370, 0.0
    %v372 = vadd.f32 %v371, 1e-05
    %v373 = vrsqrt.pop %v372
    %v374 = vmul.f32 %v373, %v372
    %v375 = vmul.f32 %v374, %v373
    %v376 = vmul.f32 0.5, %v375
    %v377 = vsub.f32 1.5, %v376
    %v378 = vmul.f32 %v373, %v377
    %vm379 = vweird.f32 %v372
    %vm380 = vweird.f32 %v373
    %vm381 = vmor %vm379, %vm380
    %v382 = vsel %vm381, %v373, %v378
    %v383 = vmul.f32 %v352, %v382
    %v384 = vmul.f32 %v360, %v383
    %v385 = vsub.f32 %v353, %v384
    %v386 = vperm.slane %v383, 0
    %v387 = vmul.f32 %v349, %v386
    %v388 = vperm.slane %v385, 0
    %v389 = vadd.f32 %v387, %v388
    %v390 = vxor.u32 %v389, 2147483648
    %v391 = vmul.f32 %v390, 1.442695
    %v392 = vpow.pop %v391
    %v393 = vadd.f32 %v392, 1.0
    %v394 = vrcp.pop %v393
    %v395 = vmul.f32 %v393, %v394
    %v396 = vsub.f32 1.0, %v395
    %v397 = vmul.f32 %v394, %v396
    %v398 = vadd.f32 %v394, %v397
    %vm399 = vweird.f32 %v393
    %vm400 = vweird.f32 %v394
    %vm401 = vmor %vm399, %vm400
    %v402 = vsel %vm401, %v394, %v398
    %v403 = vand.u32 2147483647, %v393
    %vm404 = vcmp.eq.f32.partialorder %v403, 8.507059e+37
    %v405 = vand.u32 %v393, 2147483648
    %v406 = vor.u32 1.1754944e-38, %v405
    %v407 = vsel %vm404, %v406, %v402
    %v408 = vmul.f32 1.0, %v407
    %v409 = vpack.c.bf16 %v408, %v408
    %s410 = scalar_lea.vmem [#allocation2], 192
    %v411 = vld [vmem:[%s410] sm:$0xf]
    %v412 = vld [vmem:[%s410 + $0x4] sm:$0xf]
    %v413 = vld [vmem:[%s410 + $0x8] sm:$0xf]
    %v414 = vld [vmem:[%s410 + $0xc] sm:$0xf]
    %v415 = vld [vmem:[%s410 + $0x10] sm:$0xf]
    %v416 = vld [vmem:[%s410 + $0x14] sm:$0xf]
    %v417 = vld [vmem:[%s410 + $0x18] sm:$0xf]
    %v418 = vld [vmem:[%s410 + $0x1c] sm:$0xf]
    %v419 = vld [vmem:[%s410 + $0x20] sm:$0xf]
    %v420 = vld [vmem:[%s410 + $0x24] sm:$0xf]
    %v421 = vld [vmem:[%s410 + $0x28] sm:$0xf]
    %v422 = vld [vmem:[%s410 + $0x2c] sm:$0xf]
    %v423 = vld [vmem:[%s410 + $0x30] sm:$0xf]
    %v424 = vld [vmem:[%s410 + $0x34] sm:$0xf]
    %v425 = vld [vmem:[%s410 + $0x38] sm:$0xf]
    %v426 = vld [vmem:[%s410 + $0x3c] sm:$0xf]
    %v427 = vld [vmem:[%s2 + $0x6] sm:$0x1]
    %v428 = vperm.slane %v427, 0
    %v445 = vunpack.c.l.b16 %v411
    %v446 = vunpack.c.l.b16 %v412
    %v447 = vunpack.c.l.b16 %v413
    %v448 = vunpack.c.l.b16 %v414
    %v449 = vunpack.c.l.b16 %v415
    %v450 = vunpack.c.l.b16 %v416
    %v451 = vunpack.c.l.b16 %v417
    %v452 = vunpack.c.l.b16 %v418
    %v453 = vunpack.c.l.b16 %v419
    %v454 = vunpack.c.l.b16 %v420
    %v455 = vunpack.c.l.b16 %v421
    %v456 = vunpack.c.l.b16 %v422
    %v457 = vunpack.c.l.b16 %v423
    %v458 = vunpack.c.l.b16 %v424
    %v459 = vunpack.c.l.b16 %v425
    %v460 = vunpack.c.l.b16 %v426
    %v461 = vpack.c.b16 %v446, %v445
    %v462 = vpack.c.b16 %v448, %v447
    %v463 = vpack.c.b16 %v450, %v449
    %v464 = vpack.c.b16 %v452, %v451
    %v465 = vpack.c.b16 %v454, %v453
    %v466 = vpack.c.b16 %v456, %v455
    %v467 = vpack.c.b16 %v458, %v457
    %v468 = vpack.c.b16 %v460, %v459
    %477 = vmatpush.bf16.msra.mxu0 %v468
    %478 = vmatpush.bf16.msra.mxu0 %v467
    %479 = vmatpush.bf16.msra.mxu0 %v466
    %480 = vmatpush.bf16.msra.mxu0 %v465
    %481 = vmatpush.bf16.msra.mxu0 %v464
    %482 = vmatpush.bf16.msra.mxu0 %v463
    %483 = vmatpush.bf16.msra.mxu0 %v462
    %484 = vmatpush.bf16.msra.mxu0 %v461
    %485 = vmatmul.bf16.gmra.mxu0 %v409
    %v486 = vpop.f32.mrf.mxu0
    %v487 = vadd.f32 %v428, %v486
    %v488 = vpop.f32.mrf.mxu0
    %489 = vdwg.mxu0
    %490 = vst [vmem:[%s3] sm:$0xff] %v487
    // Predicated region
    $region18: #{mlp_net_forward.1} parent=1 // pred_check
      _
    $region19: #{mlp_net_forward.1} parent=1 // pred_check_branch
      %492 = sbr.rel (0) target = $region21
    $region20: #{mlp_net_forward.1} parent=1 // pred_region
      _
    $region21: #{mlp_net_forward.1} parent=1 // pred_fallthru
      _
    // Predicated region
    $region22: #{mlp_net_forward.1} parent=1 // pred_check
      _
    $region23: #{mlp_net_forward.1} parent=1 // pred_check_branch
      %494 = sbr.rel (0) target = $region25
    $region24: #{mlp_net_forward.1} parent=1 // pred_region
      _
    $region25: #{mlp_net_forward.1} parent=1 // pred_fallthru
      _
    %495 = vsyncpa [#allocation3], 1

</llo_original>
